<compile_context>
chip_gen: v7x
topology: tpu7x:2x2x1
jax: 0.10.0
libtpu: 0.0.40
codegen_flags: <defaults>
</compile_context>

<pallas_src>
import functools

import jax
import jax.numpy as jnp
from jax.experimental import pallas as pl
from jax.experimental.pallas import tpu as pltpu

LN_EPS = 1e-5  # nn.LayerNorm default


def _round_up(v, m):
    return (v + m - 1) // m * m


def _cdiv(a, b):
    return (a + b - 1) // b


def _vmem_limit_bytes():
    """Generation-aware scoped-VMEM limit (~80% of physical per-TC VMEM)."""
    try:
        cap = pltpu.get_tpu_info().vmem_capacity_bytes
    except Exception:
        cap = 64 * 1024 * 1024  # conservative (v7x-sized) fallback
    return max(32 * 1024 * 1024, int(cap * 0.8))


def _pick_tile_m(n, outp, tile_k, x_bytes, w_bytes, out_bytes, sub_m, budget,
                 desired, use_acc):
    """Largest tile_m (<= desired, sublane-aligned) whose buffers fit VMEM."""
    tile_m = max(sub_m, min(_round_up(desired, sub_m), _round_up(n, sub_m)))

    def vmem_need(tm):
        return (2 * tm * tile_k * x_bytes            # x double-buffer
                + 2 * tile_k * outp * w_bytes        # W double-buffer
                + 2 * tm * outp * out_bytes          # out double-buffer
                + (tm * outp * 4 if use_acc else 0)  # f32 accumulator
                + 2 * 8 * outp * 4)                  # LN params block

    while vmem_need(tile_m) > budget and tile_m > sub_m:
        tile_m = max(sub_m, _round_up(tile_m // 2, sub_m))
    return tile_m


def _mlp_kernel(x_ref, w_ref, lnp_ref, o_ref, *scratch, out_feat, pad_cols):
    """Grid = (M tiles, K tiles). Accumulate over K; LN+ReLU on the last K."""
    acc_ref = scratch[0] if scratch else o_ref   # o_ref is K-resident (f32 out)
    k = pl.program_id(1)

    @pl.when(k == 0)
    def _():
        acc_ref[...] = jnp.zeros_like(acc_ref)

    # MXU matmul in the operands' native dtype (default bf16), f32 accumulate.
    acc_ref[...] += jnp.dot(x_ref[...], w_ref[...],
                            preferred_element_type=jnp.float32)

    @pl.when(k == pl.num_programs(1) - 1)
    def _():
        bias = lnp_ref[0:1, :]
        gamma = lnp_ref[1:2, :]
        beta = lnp_ref[2:3, :]
        h = acc_ref[...].astype(jnp.float32) + bias   # padded cols are exactly 0
        inv_n = 1.0 / out_feat                        # true (unpadded) divisor
        mean = jnp.sum(h, axis=-1, keepdims=True) * inv_n
        hc = h - mean
        # Two-pass variance; every zero-padded column contributes exactly
        # mean^2 to the centered sum of squares, subtracted here (pad_cols is
        # a static Python int), so padding never changes the statistics.
        sumsq = jnp.sum(hc * hc, axis=-1, keepdims=True) - pad_cols * mean * mean
        var = sumsq * inv_n
        hn = hc * jax.lax.rsqrt(var + LN_EPS)
        y = hn * gamma + beta
        o_ref[...] = jnp.maximum(y, 0.0).astype(o_ref.dtype)


def prepare_mlp_params(w, b, gamma, beta, *, mxu_dtype=jnp.bfloat16,
                       target_tile_k=None):
    """Pad / cast parameters ONCE (call at module setup, not per forward).

    w: (in_feat, out_feat)  -- PyTorch `linear.weight` transposed once.
    b, gamma, beta: (out_feat,).
    mxu_dtype: MXU operand dtype (default bf16); None = exact-f32 mode.
    """
    in_feat, out_feat = w.shape
    outp = _round_up(out_feat, 128)
    if target_tile_k is None:
        target_tile_k = 512 if outp <= 2048 else 256  # small W K-tiles for wide layers
    inp128 = _round_up(in_feat, 128)
    n_k = _cdiv(inp128, target_tile_k)
    tile_k = _round_up(_cdiv(inp128, n_k), 128)   # grid divides K, <=128 waste
    inp = tile_k * n_k

    w_dtype = w.dtype if mxu_dtype is None else mxu_dtype
    wp = jnp.pad(w, ((0, inp - in_feat), (0, outp - out_feat))).astype(w_dtype)
    lnp = jnp.stack([
        jnp.pad(b.astype(jnp.float32), (0, outp - out_feat)),
        jnp.pad(gamma.astype(jnp.float32), (0, outp - out_feat)),
        jnp.pad(beta.astype(jnp.float32), (0, outp - out_feat)),
    ])
    return dict(wp=wp, lnp=lnp, in_feat=in_feat, out_feat=out_feat,
                inp=inp, outp=outp, tile_k=tile_k, mxu_dtype=mxu_dtype)


def mlp_forward(x, params, *, tile_m=512):
    """Fused Linear + LayerNorm + ReLU.  x: (N, in_feat)."""
    n, in_feat = x.shape
    assert in_feat == params["in_feat"], "in_feat mismatch vs prepared params"
    out_feat = params["out_feat"]
    inp, outp, tile_k = params["inp"], params["outp"], params["tile_k"]
    mxu_dtype = params["mxu_dtype"]

    out_dtype = x.dtype
    x_dtype = x.dtype if mxu_dtype is None else mxu_dtype
    x_bytes = jnp.dtype(x_dtype).itemsize
    w_bytes = jnp.dtype(params["wp"].dtype).itemsize
    out_bytes = jnp.dtype(out_dtype).itemsize
    sub_m = max(8, 32 // x_bytes)   # sublane packing: f32->8, bf16->16, 8-bit->32

    vmem_limit = _vmem_limit_bytes()
    use_acc = (jnp.dtype(out_dtype) != jnp.dtype(jnp.float32))
    tile_m = _pick_tile_m(n, outp, tile_k, x_bytes, w_bytes, out_bytes, sub_m,
                          int(vmem_limit * 0.9), tile_m, use_acc)

    # Give the "parallel" M axis >= 2 tiles when N allows it so both
    # TensorCores of a v7x megacore get work (no effect on v5e/v6e).
    while n > sub_m and _cdiv(n, tile_m) < 2 and tile_m > sub_m:
        tile_m = max(sub_m, _round_up(tile_m // 2, sub_m))

    n_pad = _round_up(n, tile_m)

    # Per-call activation padding / cast only (weights were prepared once).
    xp = x
    if (n_pad, inp) != (n, in_feat):
        xp = jnp.pad(x, ((0, n_pad - n), (0, inp - in_feat)))
    if xp.dtype != jnp.dtype(x_dtype):
        xp = xp.astype(x_dtype)

    grid = (n_pad // tile_m, inp // tile_k)
    scratch = [pltpu.VMEM((tile_m, outp), jnp.float32)] if use_acc else []

    out = pl.pallas_call(
        functools.partial(_mlp_kernel, out_feat=out_feat,
                          pad_cols=outp - out_feat),
        out_shape=jax.ShapeDtypeStruct((n_pad, outp), out_dtype),
        grid_spec=pltpu.PrefetchScalarGridSpec(
            num_scalar_prefetch=0,
            grid=grid,
            in_specs=[
                pl.BlockSpec((tile_m, tile_k), lambda i, k: (i, k)),  # x tile
                pl.BlockSpec((tile_k, outp), lambda i, k: (k, 0)),    # W K-tile
                pl.BlockSpec((3, outp), lambda i, k: (0, 0)),         # bias/gamma/beta
            ],
            out_specs=pl.BlockSpec((tile_m, outp), lambda i, k: (i, 0)),
            scratch_shapes=scratch,
        ),
        compiler_params=pltpu.CompilerParams(
            dimension_semantics=("parallel", "arbitrary"),
            vmem_limit_bytes=vmem_limit,
        ),
    )(xp, params["wp"], params["lnp"])

    # Strip padding back to the logical shape.
    return out[:n, :out_feat]


if __name__ == "__main__":
    key = jax.random.PRNGKey(0)
    k_x, k_w, k_b = jax.random.split(key, 3)

    N, IN_FEAT, OUT_FEAT = 16, 32, 64

    # Deterministic synthetic parameters (PyTorch Linear-like init scale).
    x = jax.random.normal(k_x, (N, IN_FEAT), dtype=jnp.float32)
    bound = 1.0 / (IN_FEAT ** 0.5)
    w = jax.random.uniform(k_w, (IN_FEAT, OUT_FEAT), jnp.float32, -bound, bound)
    b = jax.random.uniform(k_b, (OUT_FEAT,), jnp.float32, -bound, bound)
    gamma = jnp.ones((OUT_FEAT,), jnp.float32)   # nn.LayerNorm weight init
    beta = jnp.zeros((OUT_FEAT,), jnp.float32)   # nn.LayerNorm bias init

    def reference(xf):
        h = xf @ w + b
        mu = h.mean(-1, keepdims=True)
        var = ((h - mu) ** 2).mean(-1, keepdims=True)
        return jnp.maximum((h - mu) / jnp.sqrt(var + LN_EPS) * gamma + beta, 0.0)

    ref = reference(x)

    # Default production path: bf16 MXU operands, f32 accumulation, f32 out.
    params = prepare_mlp_params(w, b, gamma, beta)          # mxu_dtype=bf16
    out = jax.block_until_ready(mlp_forward(x, params))
    assert out.shape == ref.shape, "shape mismatch vs reference"
    assert jnp.allclose(out, ref, atol=5e-2, rtol=5e-2), "bf16-MXU path mismatch"

    # Opt-in exact-f32 validation path.
    params_f32 = prepare_mlp_params(w, b, gamma, beta, mxu_dtype=None)
    out_f32 = jax.block_until_ready(mlp_forward(x, params_f32))
    assert jnp.allclose(out_f32, ref, atol=1e-3, rtol=1e-3), "f32 path mismatch"

    # bf16 activations/outputs (exercises the f32 accumulator-scratch path).
    x_bf16 = x.astype(jnp.bfloat16)
    out_bf16 = jax.block_until_ready(mlp_forward(x_bf16, params))
    ref_bf16 = reference(x_bf16.astype(jnp.float32))
    assert jnp.allclose(out_bf16.astype(jnp.float32), ref_bf16,
                        atol=8e-2, rtol=8e-2), "bf16-out path mismatch"

    print("KERNEL_OK")
</pallas_src>

<mosaic_0001>
module attributes {stable_mosaic.version = 11 : i64} {
  func.func @_mlp_kernel(%arg0: i32, %arg1: i32, %arg2: memref<16x128xbf16, #tpu.memory_space<vmem>>, %arg3: memref<128x128xbf16, #tpu.memory_space<vmem>>, %arg4: memref<3x128xf32, #tpu.memory_space<vmem>>, %arg5: memref<16x128xf32, #tpu.memory_space<vmem>>) attributes {dimension_semantics = [#tpu.dimension_semantics<parallel>, #tpu.dimension_semantics<arbitrary>], iteration_bounds = array<i64: 1, 1>, scalar_prefetch = 0 : i64, scratch_operands = 0 : i64, tpu.core_type = #tpu.core_type<tc>, window_params = [{transform_indices = @transform_0, window_bounds = array<i64: 16, 128>}, {transform_indices = @transform_1, window_bounds = array<i64: 128, 128>}, {pipeline_mode = #tpu.pipeline_mode<synchronous>, transform_indices = @transform_2, window_bounds = array<i64: 3, 128>}, {transform_indices = @transform_3, window_bounds = array<i64: 16, 128>}]} {
    %c0_i32 = arith.constant 0 : i32
    %0 = arith.cmpi eq, %arg1, %c0_i32 : i32
    %1 = arith.extui %0 : i1 to i32
    %c0_i32_0 = arith.constant 0 : i32
    %2 = arith.cmpi ne, %1, %c0_i32_0 : i32
    scf.if %2 {
      %cst_10 = arith.constant 0.000000e+00 : f32
      %12 = vector.broadcast %cst_10 : f32 to vector<16x128xf32>
      %c0_11 = arith.constant 0 : index
      %c0_12 = arith.constant 0 : index
      %13 = vector.load %arg5[%c0_11, %c0_12] : memref<16x128xf32, #tpu.memory_space<vmem>>, vector<16x128xf32>
      tpu.vector_store %arg5[%c0_11, %c0_12], %12 {strides = array<i32>} : memref<16x128xf32, #tpu.memory_space<vmem>>, vector<16x128xf32>,
    } else {
    }
    %c0 = arith.constant 0 : index
    %c0_1 = arith.constant 0 : index
    %3 = vector.load %arg5[%c0, %c0_1] : memref<16x128xf32, #tpu.memory_space<vmem>>, vector<16x128xf32>
    %c0_2 = arith.constant 0 : index
    %c0_3 = arith.constant 0 : index
    %4 = vector.load %arg2[%c0_2, %c0_3] : memref<16x128xbf16, #tpu.memory_space<vmem>>, vector<16x128xbf16>
    %c0_4 = arith.constant 0 : index
    %c0_5 = arith.constant 0 : index
    %5 = vector.load %arg3[%c0_4, %c0_5] : memref<128x128xbf16, #tpu.memory_space<vmem>>, vector<128x128xbf16>
    %cst = arith.constant dense<0.000000e+00> : vector<16x128xf32>
    %6 = tpu.matmul %4, %5, %cst {dimension_numbers = #tpu.dot_dimension_numbers<[1], [0], [0], [1], [0, 0, 1, 1], [], []>} : vector<16x128xbf16>, vector<128x128xbf16>, vector<16x128xf32> -> vector<16x128xf32>
    %7 = arith.addf %3, %6 : vector<16x128xf32>
    %c0_6 = arith.constant 0 : index
    %c0_7 = arith.constant 0 : index
    %8 = vector.load %arg5[%c0_6, %c0_7] : memref<16x128xf32, #tpu.memory_space<vmem>>, vector<16x128xf32>
    tpu.vector_store %arg5[%c0_6, %c0_7], %7 {strides = array<i32>} : memref<16x128xf32, #tpu.memory_space<vmem>>, vector<16x128xf32>,
    %c0_i32_8 = arith.constant 0 : i32
    %9 = arith.cmpi eq, %arg1, %c0_i32_8 : i32
    %10 = arith.extui %9 : i1 to i32
    %c0_i32_9 = arith.constant 0 : i32
    %11 = arith.cmpi ne, %10, %c0_i32_9 : i32
    scf.if %11 {
      %c0_10 = arith.constant 0 : index
      %c0_11 = arith.constant 0 : index
      %12 = vector.load %arg4[%c0_10, %c0_11] : memref<3x128xf32, #tpu.memory_space<vmem>>, vector<1x128xf32>
      %c1 = arith.constant 1 : index
      %c0_12 = arith.constant 0 : index
      %13 = vector.load %arg4[%c1, %c0_12] : memref<3x128xf32, #tpu.memory_space<vmem>>, vector<1x128xf32>
      %c2 = arith.constant 2 : index
      %c0_13 = arith.constant 0 : index
      %14 = vector.load %arg4[%c2, %c0_13] : memref<3x128xf32, #tpu.memory_space<vmem>>, vector<1x128xf32>
      %c0_14 = arith.constant 0 : index
      %c0_15 = arith.constant 0 : index
      %15 = vector.load %arg5[%c0_14, %c0_15] : memref<16x128xf32, #tpu.memory_space<vmem>>, vector<16x128xf32>
      %16 = vector.broadcast %12 : vector<1x128xf32> to vector<16x128xf32>
      %17 = arith.addf %15, %16 : vector<16x128xf32>
      %cst_16 = arith.constant dense<0.000000e+00> : vector<16xf32>
      %18 = vector.multi_reduction <add>, %17, %cst_16 [1] : vector<16x128xf32> to vector<16xf32>
      %19 = vector.shape_cast %18 : vector<16xf32> to vector<16x1xf32>
      %cst_17 = arith.constant 1.562500e-02 : f32
      %20 = vector.broadcast %cst_17 : f32 to vector<16x1xf32>
      %21 = arith.mulf %19, %20 : vector<16x1xf32>
      %22 = vector.broadcast %21 : vector<16x1xf32> to vector<16x128xf32>
      %23 = arith.subf %17, %22 : vector<16x128xf32>
      %24 = arith.mulf %23, %23 : vector<16x128xf32>
      %cst_18 = arith.constant dense<0.000000e+00> : vector<16xf32>
      %25 = vector.multi_reduction <add>, %24, %cst_18 [1] : vector<16x128xf32> to vector<16xf32>
      %26 = vector.shape_cast %25 : vector<16xf32> to vector<16x1xf32>
      %cst_19 = arith.constant 6.400000e+01 : f32
      %27 = vector.broadcast %cst_19 : f32 to vector<16x1xf32>
      %28 = arith.mulf %27, %21 : vector<16x1xf32>
      %29 = arith.mulf %28, %21 : vector<16x1xf32>
      %30 = arith.subf %26, %29 : vector<16x1xf32>
      %cst_20 = arith.constant 1.562500e-02 : f32
      %31 = vector.broadcast %cst_20 : f32 to vector<16x1xf32>
      %32 = arith.mulf %30, %31 : vector<16x1xf32>
      %cst_21 = arith.constant 9.99999974E-6 : f32
      %33 = vector.broadcast %cst_21 : f32 to vector<16x1xf32>
      %34 = arith.addf %32, %33 : vector<16x1xf32>
      %35 = math.rsqrt %34 : vector<16x1xf32>
      %36 = vector.broadcast %35 : vector<16x1xf32> to vector<16x128xf32>
      %37 = arith.mulf %23, %36 : vector<16x128xf32>
      %38 = vector.broadcast %13 : vector<1x128xf32> to vector<16x128xf32>
      %39 = arith.mulf %37, %38 : vector<16x128xf32>
      %40 = vector.broadcast %14 : vector<1x128xf32> to vector<16x128xf32>
      %41 = arith.addf %39, %40 : vector<16x128xf32>
      %cst_22 = arith.constant 0.000000e+00 : f32
      %42 = vector.broadcast %cst_22 : f32 to vector<16x128xf32>
      %43 = arith.maximumf %41, %42 : vector<16x128xf32>
      %c0_23 = arith.constant 0 : index
      %c0_24 = arith.constant 0 : index
      %44 = vector.load %arg5[%c0_23, %c0_24] : memref<16x128xf32, #tpu.memory_space<vmem>>, vector<16x128xf32>
      tpu.vector_store %arg5[%c0_23, %c0_24], %43 {strides = array<i32>} : memref<16x128xf32, #tpu.memory_space<vmem>>, vector<16x128xf32>,
    } else {
    }
    return
  }
  func.func @transform_0(%arg0: i32, %arg1: i32) -> (i32, i32) {
    %c0_i32 = arith.constant 0 : i32
    return %arg0, %arg1 : i32, i32
  }
  func.func @transform_1(%arg0: i32, %arg1: i32) -> (i32, i32) {
    %c0_i32 = arith.constant 0 : i32
    %c0_i32_0 = arith.constant 0 : i32
    return %arg1, %c0_i32 : i32, i32
  }
  func.func @transform_2(%arg0: i32, %arg1: i32) -> (i32, i32) {
    %c0_i32 = arith.constant 0 : i32
    %c0_i32_0 = arith.constant 0 : i32
    %c0_i32_1 = arith.constant 0 : i32
    return %c0_i32, %c0_i32_0 : i32, i32
  }
  func.func @transform_3(%arg0: i32, %arg1: i32) -> (i32, i32) {
    %c0_i32 = arith.constant 0 : i32
    %c0_i32_0 = arith.constant 0 : i32
    return %arg0, %c0_i32 : i32, i32
  }
}

</mosaic_0001>

<llo_original>
// kernel: tpu_custom_call.1
$region0: #{tpu_custom_call.1}
  #allocation0 [shape = 'u32[]', space=smem, size = 0x4, offset = 0x4, fixed_abs, tag = 'smem constant byte address 0x4 - core index']
  #allocation1 [shape = 'u32[144,128]{1,0:T(1,128)}', space=vmem, size = 0x12000, scoped, tag = 'internal scratch']
  %s0 = inlined_call_operand.hbm [shape: bf16[16,128], index: 0, kind: input, shape index: {}]
  %s1 = inlined_call_operand.hbm [shape: bf16[128,128], index: 1, kind: input, shape index: {}]
  %s2 = inlined_call_operand.vmem [shape: f32[3,128], index: 2, kind: input, shape index: {}]
  %s3 = inlined_call_operand.hbm [shape: f32[16,128], index: 3, kind: output, shape index: {}]
  %s4 = sld [smem:[#allocation0]]
  $region38: #{tpu_custom_call.1} parent=0
    _
  %s6 = ssub.s32 1, %s4
  %s7 = scalar_select 0, %s6, %s4
  $region1: #{tpu_custom_call.1} parent=0
    #allocation2 [shape = 'u8[4096]{0}', space=vmem, size = 0x1000, scoped, tag = 'input window, operand 0, single buffered']
    #allocation3 [shape = 's32[1]{0}', space=sflag, size = 0x4, scoped, tag = 'scoped memory for tpu_custom_call.1']
    #allocation4 [shape = 's32[1]{0}', space=sflag, size = 0x4, scoped, tag = 'scoped memory for tpu_custom_call.1']
    #allocation5 [shape = 'u8[32768]{0}', space=vmem, size = 0x8000, scoped, tag = 'input window, operand 1, single buffered']
    #allocation6 [shape = 's32[1]{0}', space=sflag, size = 0x4, scoped, tag = 'scoped memory for tpu_custom_call.1']
    #allocation7 [shape = 'u8[8192]{0}', space=vmem, size = 0x2000, scoped, tag = 'output window, operand 0, single buffered']
    %8 = vsyncpa [#allocation3], 0
    %9 = vsyncpa [#allocation6], 0
    %10 = vsyncpa [#allocation4], 0
    // Predicated region
    $region2: #{tpu_custom_call.1} parent=1 // pred_check
      _
    $region3: #{tpu_custom_call.1} parent=1 // pred_check_branch
      %12 = sbr.rel (0) target = $region5
    $region4: #{tpu_custom_call.1} parent=1 // pred_region
      %s14 = ssub.s32 128, 128
      %15 = vsyncadd [#allocation3], %s14
      %s16 = sshll.u32 [#allocation2], 4
      %s17 = int_to_ptr.vmem [resolvable:$true] %s16
      %22 = dma.hbm_to_vmem [thread:$0]  %s0, 128, %s17, [#allocation3], 64, 64, 4
    $region5: #{tpu_custom_call.1} parent=1 // pred_fallthru
      _
    // Predicated region
    $region6: #{tpu_custom_call.1} parent=1 // pred_check
      _
    $region7: #{tpu_custom_call.1} parent=1 // pred_check_branch
      %24 = sbr.rel (0) target = $region9
    $region8: #{tpu_custom_call.1} parent=1 // pred_region
      %s26 = ssub.s32 1024, 1024
      %27 = vsyncadd [#allocation6], %s26
      %s28 = sshll.u32 [#allocation5], 4
      %s29 = int_to_ptr.vmem [resolvable:$true] %s28
      %34 = dma.hbm_to_vmem [thread:$0]  %s1, 1024, %s29, [#allocation6], 64, 64, 4
    $region9: #{tpu_custom_call.1} parent=1 // pred_fallthru
      _
    // Predicated region
    $region10: #{tpu_custom_call.1} parent=1 // pred_check
      _
    $region11: #{tpu_custom_call.1} parent=1 // pred_check_branch
      %36 = sbr.rel (0) target = $region13
    $region12: #{tpu_custom_call.1} parent=1 // pred_region
      _
    $region13: #{tpu_custom_call.1} parent=1 // pred_fallthru
      _
    // Predicated region
    $region14: #{tpu_custom_call.1} parent=1 // pred_check
      _
    $region15: #{tpu_custom_call.1} parent=1 // pred_check_branch
      %38 = sbr.rel (0) target = $region17
    $region16: #{tpu_custom_call.1} parent=1 // pred_region
      %39 = dma.done [#allocation3], 128
    $region17: #{tpu_custom_call.1} parent=1 // pred_fallthru
      _
    // Predicated region
    $region18: #{tpu_custom_call.1} parent=1 // pred_check
      _
    $region19: #{tpu_custom_call.1} parent=1 // pred_check_branch
      %41 = sbr.rel (0) target = $region21
    $region20: #{tpu_custom_call.1} parent=1 // pred_region
      %42 = dma.done [#allocation6], 1024
    $region21: #{tpu_custom_call.1} parent=1 // pred_fallthru
      _
    %p44 = scmp.eq.s32.totalorder 0, 0
    // Predicated region
    $region22: #{tpu_custom_call.1} parent=1 // pred_check
      %p45 = pneg %p44
    $region23: #{tpu_custom_call.1} parent=1 // pred_check_branch
      %47 = sbr.rel (%p45) target = $region25
    $region24: #{tpu_custom_call.1} parent=1 // pred_region
      %48 = vst [vmem:[#allocation7] sm:$0xff] 0.0
      %49 = vst [vmem:[#allocation7 + $0x8] sm:$0xff] 0.0
    $region25: #{tpu_custom_call.1} parent=1 // pred_fallthru
      _
    %v50 = vld [vmem:[#allocation7] sm:$0xff]
    %v51 = vld [vmem:[#allocation7 + $0x8] sm:$0xff]
    %v52 = vld [vmem:[#allocation2] sm:$0xf]
    %v53 = vld [vmem:[#allocation2 + $0x4] sm:$0xf]
    %v54 = vld [vmem:[#allocation5] sm:$0xf]
    %v55 = vld [vmem:[#allocation5 + $0x4] sm:$0xf]
    %v56 = vld [vmem:[#allocation5 + $0x8] sm:$0xf]
    %v57 = vld [vmem:[#allocation5 + $0xc] sm:$0xf]
    %v58 = vld [vmem:[#allocation5 + $0x10] sm:$0xf]
    %v59 = vld [vmem:[#allocation5 + $0x14] sm:$0xf]
    %v60 = vld [vmem:[#allocation5 + $0x18] sm:$0xf]
    %v61 = vld [vmem:[#allocation5 + $0x1c] sm:$0xf]
    %v62 = vld [vmem:[#allocation5 + $0x20] sm:$0xf]
    %v63 = vld [vmem:[#allocation5 + $0x24] sm:$0xf]
    %v64 = vld [vmem:[#allocation5 + $0x28] sm:$0xf]
    %v65 = vld [vmem:[#allocation5 + $0x2c] sm:$0xf]
    %v66 = vld [vmem:[#allocation5 + $0x30] sm:$0xf]
    %v67 = vld [vmem:[#allocation5 + $0x34] sm:$0xf]
    %v68 = vld [vmem:[#allocation5 + $0x38] sm:$0xf]
    %v69 = vld [vmem:[#allocation5 + $0x3c] sm:$0xf]
    %v72 = vunpack.c.l.b16 %v52
    %v73 = vunpack.c.l.b16 %v53
    %v74 = vpack.c.b16 %v73, %v72
    %v92 = vunpack.c.l.b16 %v54
    %v93 = vunpack.c.l.b16 %v55
    %v94 = vunpack.c.l.b16 %v56
    %v95 = vunpack.c.l.b16 %v57
    %v96 = vunpack.c.l.b16 %v58
    %v97 = vunpack.c.l.b16 %v59
    %v98 = vunpack.c.l.b16 %v60
    %v99 = vunpack.c.l.b16 %v61
    %v100 = vunpack.c.l.b16 %v62
    %v101 = vunpack.c.l.b16 %v63
    %v102 = vunpack.c.l.b16 %v64
    %v103 = vunpack.c.l.b16 %v65
    %v104 = vunpack.c.l.b16 %v66
    %v105 = vunpack.c.l.b16 %v67
    %v106 = vunpack.c.l.b16 %v68
    %v107 = vunpack.c.l.b16 %v69
    %v108 = vpack.c.b16 %v93, %v92
    %v109 = vpack.c.b16 %v95, %v94
    %v110 = vpack.c.b16 %v97, %v96
    %v111 = vpack.c.b16 %v99, %v98
    %v112 = vpack.c.b16 %v101, %v100
    %v113 = vpack.c.b16 %v103, %v102
    %v114 = vpack.c.b16 %v105, %v104
    %v115 = vpack.c.b16 %v107, %v106
    %124 = vmatprep.subr.bf16.mxu0 0
    %125 = vmatpush1.bf16.msra.mxu0 %v108
    %126 = vmatprep.subr.bf16.mxu0 0
    %127 = vmatpush1.bf16.msra.mxu0 %v109
    %128 = vmatprep.subr.bf16.mxu0 0
    %129 = vmatpush1.bf16.msra.mxu0 %v110
    %130 = vmatprep.subr.bf16.mxu0 0
    %131 = vmatpush1.bf16.msra.mxu0 %v111
    %132 = vmatprep.subr.bf16.mxu0 0
    %133 = vmatpush1.bf16.msra.mxu0 %v112
    %134 = vmatprep.subr.bf16.mxu0 0
    %135 = vmatpush1.bf16.msra.mxu0 %v113
    %136 = vmatprep.subr.bf16.mxu0 0
    %137 = vmatpush1.bf16.msra.mxu0 %v114
    %138 = vmatprep.subr.bf16.mxu0 0
    %139 = vmatpush1.bf16.msra.mxu0 %v115
    %140 = vmatprep.subr.bf16.mxu0 0
    %141 = vmatpush1.bf16.msra.mxu0 0
    %142 = vmatprep.subr.bf16.mxu0 0
    %143 = vmatpush1.bf16.msra.mxu0 0
    %144 = vmatprep.subr.bf16.mxu0 0
    %145 = vmatpush1.bf16.msra.mxu0 0
    %146 = vmatprep.subr.bf16.mxu0 0
    %147 = vmatpush1.bf16.msra.mxu0 0
    %148 = vmatprep.subr.bf16.mxu0 0
    %149 = vmatpush1.bf16.msra.mxu0 0
    %150 = vmatprep.subr.bf16.mxu0 0
    %151 = vmatpush1.bf16.msra.mxu0 0
    %152 = vmatprep.subr.bf16.mxu0 0
    %153 = vmatpush1.bf16.msra.mxu0 0
    %154 = vmatprep.subr.bf16.mxu0 0
    %155 = vmatpush1.bf16.msra.mxu0 0
    %156 = vmatprep.mubr.bf16.mxu0 0
    %157 = vmatmul.mubr.bf16.gmra.mrb[0].mxu0 %v74
    %v158 = vpop.f32.mrb[0].mxu0
    %v159 = vadd.f32 0.0, %v158
    %v160 = vpop.f32.mrb[0].mxu0
    %v161 = vpop.f32.mrb[0].mxu0
    %v162 = vadd.f32 0.0, %v161
    %v163 = vpop.f32.mrb[0].mxu0
    %164 = vdwg.mxu0
    %v165 = vadd.f32 %v50, %v159
    %v166 = vadd.f32 %v51, %v162
    %167 = vst [vmem:[#allocation7] sm:$0xff] %v165
    %168 = vst [vmem:[#allocation7 + $0x8] sm:$0xff] %v166
    // Predicated region
    $region26: #{tpu_custom_call.1} parent=1 // pred_check
      %p169 = pneg %p44
    $region27: #{tpu_custom_call.1} parent=1 // pred_check_branch
      %171 = sbr.rel (%p169) target = $region29
    $region28: #{tpu_custom_call.1} parent=1 // pred_region
      %v172 = vld [vmem:[%s2] sm:$0x1]
      %v173 = vld [vmem:[%s2 + $0x1] sm:$0x1]
      %v174 = vld [vmem:[%s2 + $0x2] sm:$0x1]
      %v175 = vld [vmem:[#allocation7] sm:$0xff]
      %v176 = vld [vmem:[#allocation7 + $0x8] sm:$0xff]
      %v177 = vlaneseq
      %v178 = vshrl.u32 %v177, 7
      %v179 = vsub.s32 0, %v178
      %v180 = vrot.slane %v172, %v179
      %v181 = vadd.f32 %v175, %v180
      %v182 = vadd.f32 %v176, %v180
      %183 = vadd.xlane.f32.xlu0 %v181
      %v184 = vpop.xlane.xlu0 %183
      %185 = vadd.xlane.f32.xlu0 %v182
      %v186 = vpop.xlane.xlu0 %185
      %v187 = vmul.f32 %v184, 0.015625
      %v188 = vmul.f32 %v186, 0.015625
      %v189 = vsub.f32 %v181, %v187
      %v190 = vsub.f32 %v182, %v188
      %v191 = vmul.f32 %v189, %v189
      %v192 = vmul.f32 %v190, %v190
      %193 = vadd.xlane.f32.xlu0 %v191
      %v194 = vpop.xlane.xlu0 %193
      %195 = vadd.xlane.f32.xlu0 %v192
      %v196 = vpop.xlane.xlu0 %195
      %v197 = vmul.f32 %v187, 64.0
      %v198 = vmul.f32 %v188, 64.0
      %v199 = vmul.f32 %v197, %v187
      %v200 = vmul.f32 %v198, %v188
      %v201 = vsub.f32 %v194, %v199
      %v202 = vsub.f32 %v196, %v200
      %v203 = vmul.f32 %v201, 0.015625
      %v204 = vmul.f32 %v202, 0.015625
      %v205 = vadd.f32 %v203, 1e-05
      %v206 = vadd.f32 %v204, 1e-05
      %v207 = vrsqrt.pop %v205
      %v208 = vrsqrt.pop %v206
      %v209 = vmul.f32 %v189, %v207
      %v210 = vmul.f32 %v190, %v208
      %v211 = vlaneseq
      %v212 = vshrl.u32 %v211, 7
      %v213 = vsub.s32 0, %v212
      %v214 = vrot.slane %v173, %v213
      %v215 = vmul.f32 %v209, %v214
      %v216 = vmul.f32 %v210, %v214
      %v217 = vlaneseq
      %v218 = vshrl.u32 %v217, 7
      %v219 = vsub.s32 0, %v218
      %v220 = vrot.slane %v174, %v219
      %v221 = vadd.f32 %v215, %v220
      %v222 = vadd.f32 %v216, %v220
      %v223 = vmax.f32 %v221, 0.0
      %v224 = vmax.f32 %v222, 0.0
      %225 = vst [vmem:[#allocation7] sm:$0xff] %v223
      %226 = vst [vmem:[#allocation7 + $0x8] sm:$0xff] %v224
    $region29: #{tpu_custom_call.1} parent=1 // pred_fallthru
      _
    // Predicated region
    $region30: #{tpu_custom_call.1} parent=1 // pred_check
      _
    $region31: #{tpu_custom_call.1} parent=1 // pred_check_branch
      %228 = sbr.rel (0) target = $region33
    $region32: #{tpu_custom_call.1} parent=1 // pred_region
      %s230 = ssub.s32 256, 256
      %231 = vsyncadd [#allocation4], %s230
      %s232 = sshll.u32 [#allocation7], 4
      %s233 = int_to_ptr.vmem [resolvable:$true] %s232
      %238 = dma.vmem_to_hbm [thread:$0]  %s233, 256, %s3, [#allocation4], 128, 128, 8
    $region33: #{tpu_custom_call.1} parent=1 // pred_fallthru
      _
    // Predicated region
    $region34: #{tpu_custom_call.1} parent=1 // pred_check
      _
    $region35: #{tpu_custom_call.1} parent=1 // pred_check_branch
      %240 = sbr.rel (0) target = $region37
    $region36: #{tpu_custom_call.1} parent=1 // pred_region
      %241 = dma.done [#allocation4], 256
    $region37: #{tpu_custom_call.1} parent=1 // pred_fallthru
      _
    %242 = vsyncpa [#allocation3], 1
    %243 = vsyncpa [#allocation6], 1
    %244 = vsyncpa [#allocation4], 1

</llo_original>
